<compile_context>
chip_gen: v7x
topology: tpu7x:2x2x1
jax: 0.10.0
libtpu: 0.0.40
codegen_flags: <defaults>
</compile_context>

<pallas_src>
import jax
import jax.numpy as jnp
from jax.experimental import pallas as pl
from jax.experimental.pallas import tpu as pltpu

LN_EPS = 1e-5  # PyTorch nn.LayerNorm default


def head_kernel(x_ref, g1_ref, b1_ref, wfc_ref, bfc_ref,
                g2_ref, b2_ref, wout_ref, bout_ref, o_ref, pool_ref):
    s = pl.program_id(1)
    ns = pl.num_programs(1)

    # --- init the running max accumulator on the first S step ---
    @pl.when(s == 0)
    def _():
        pool_ref[...] = jnp.full(pool_ref.shape, -jnp.inf, pool_ref.dtype)

    # --- running max-pool over the sequence axis (elementwise, VPU) ---
    blk = x_ref[...]                               # [tb, ts, E]
    m = pool_ref[...]                              # [tb, E]
    for i in range(blk.shape[1]):                  # static, unrolled
        m = jnp.maximum(m, blk[:, i, :])
    pool_ref[...] = m

    # --- epilogue only on the last S step ---
    @pl.when(s == ns - 1)
    def _():
        pooled = pool_ref[...]                     # [tb, E]

        # LayerNorm over embed dim
        mean1 = jnp.mean(pooled, axis=-1, keepdims=True)
        c1 = pooled - mean1
        var1 = jnp.mean(c1 * c1, axis=-1, keepdims=True)
        h = c1 * jax.lax.rsqrt(var1 + LN_EPS)
        h = h * g1_ref[...] + b1_ref[...]          # [tb, E]

        # ReLU (+ Dropout identity)
        h = jnp.maximum(h, 0.0)

        # Linear E -> H (MXU)
        h = jnp.dot(h, wfc_ref[...], preferred_element_type=jnp.float32)
        h = h + bfc_ref[...]                       # [tb, H]

        # LayerNorm over hidden dim
        mean2 = jnp.mean(h, axis=-1, keepdims=True)
        c2 = h - mean2
        var2 = jnp.mean(c2 * c2, axis=-1, keepdims=True)
        h = c2 * jax.lax.rsqrt(var2 + LN_EPS)
        h = h * g2_ref[...] + b2_ref[...]          # [tb, H]

        # ReLU (+ Dropout identity)
        h = jnp.maximum(h, 0.0)

        # Linear H -> num_classes (padded to lane-dense 128 cols)
        out = jnp.dot(h, wout_ref[...], preferred_element_type=jnp.float32)
        o_ref[...] = (out + bout_ref[...]).astype(o_ref.dtype)   # [tb, CP]


def model_head(x, params, *, tb=8, ts=8):
    """x: [B, S, E] f32 (backbone last_hidden_state). Returns [B, C]."""
    B, S, E = x.shape
    H = params["w_fc"].shape[1]
    C = params["w_out"].shape[1]
    CP = ((C + 127) // 128) * 128                  # lane-dense output width

    tb = min(tb, B)
    ts = min(ts, S)
    assert B % tb == 0 and S % ts == 0, "tile sizes must divide B and S"
    assert (tb % 8 == 0 or tb == B), "tb must be 8-aligned (output sublane)"
    assert (ts % 8 == 0 or ts == S) and (E % 128 == 0), "x block layout"

    # Pad the tiny classifier to 128 lanes (zeros), slice back outside.
    w_out_p = jnp.pad(params["w_out"], ((0, 0), (0, CP - C)))
    b_out_p = jnp.pad(params["b_out"], (0, CP - C)).reshape(1, CP)

    args = (
        x,
        params["ln1_g"].reshape(1, E), params["ln1_b"].reshape(1, E),
        params["w_fc"], params["b_fc"].reshape(1, H),
        params["ln2_g"].reshape(1, H), params["ln2_b"].reshape(1, H),
        w_out_p, b_out_p,
    )

    def const2d(shape):
        # constant block index -> param stays resident in VMEM across steps
        return pl.BlockSpec(shape, lambda b, s: (0, 0))

    in_specs = [
        pl.BlockSpec((tb, ts, E), lambda b, s: (b, s, 0)),   # streamed x
        const2d((1, E)), const2d((1, E)),                    # ln1 g/b
        const2d((E, H)), const2d((1, H)),                    # fc W/b
        const2d((1, H)), const2d((1, H)),                    # ln2 g/b
        const2d((H, CP)), const2d((1, CP)),                  # out W/b (padded)
    ]
    out_spec = pl.BlockSpec((tb, CP), lambda b, s: (b, 0))

    grid_spec = pltpu.PrefetchScalarGridSpec(
        num_scalar_prefetch=0,
        grid=(B // tb, S // ts),                   # reduction axis (S) last
        in_specs=in_specs,
        out_specs=out_spec,
        scratch_shapes=[pltpu.VMEM((tb, E), jnp.float32)],   # pooled accumulator
    )

    out_padded = pl.pallas_call(
        head_kernel,
        out_shape=jax.ShapeDtypeStruct((B, CP), jnp.float32),
        grid_spec=grid_spec,
        compiler_params=pltpu.CompilerParams(
            dimension_semantics=("parallel", "arbitrary"),
            vmem_limit_bytes=32 * 1024 * 1024,
        ),
    )(*args)

    return out_padded[:, :C]


def init_params(key, embed_size, hidden_dim, num_classes):
    k1, k2, k3, k4 = jax.random.split(key, 4)
    scale_fc = 1.0 / jnp.sqrt(embed_size)
    scale_out = 1.0 / jnp.sqrt(hidden_dim)
    return {
        "ln1_g": jnp.ones((embed_size,), jnp.float32),
        "ln1_b": jnp.zeros((embed_size,), jnp.float32),
        "w_fc": (jax.random.uniform(k1, (embed_size, hidden_dim),
                                    jnp.float32, -1.0, 1.0) * scale_fc),
        "b_fc": (jax.random.uniform(k2, (hidden_dim,),
                                    jnp.float32, -1.0, 1.0) * scale_fc),
        "ln2_g": jnp.ones((hidden_dim,), jnp.float32),
        "ln2_b": jnp.zeros((hidden_dim,), jnp.float32),
        "w_out": (jax.random.uniform(k3, (hidden_dim, num_classes),
                                     jnp.float32, -1.0, 1.0) * scale_out),
        "b_out": (jax.random.uniform(k4, (num_classes,),
                                     jnp.float32, -1.0, 1.0) * scale_out),
    }


def reference_head(x, params):
    """Pure-JAX reference for correctness check."""
    pooled = jnp.max(x, axis=1)

    def ln(v, g, b):
        m = jnp.mean(v, axis=-1, keepdims=True)
        var = jnp.mean((v - m) ** 2, axis=-1, keepdims=True)
        return (v - m) * jax.lax.rsqrt(var + LN_EPS) * g + b

    h = jnp.maximum(ln(pooled, params["ln1_g"], params["ln1_b"]), 0.0)
    h = h @ params["w_fc"] + params["b_fc"]
    h = jnp.maximum(ln(h, params["ln2_g"], params["ln2_b"]), 0.0)
    return h @ params["w_out"] + params["b_out"]


if __name__ == "__main__":
    # Small stand-in shapes for the backbone output (batch, seq, embed).
    B, S, E = 16, 16, 256
    HIDDEN, NUM_CLASSES = 128, 8

    key = jax.random.PRNGKey(0)
    kx, kp = jax.random.split(key)
    x = jax.random.normal(kx, (B, S, E), jnp.float32)
    params = init_params(kp, E, HIDDEN, NUM_CLASSES)

    out = model_head(x, params, tb=8, ts=8)   # grid = (2, 2)
    out = jax.block_until_ready(out)

    ref = reference_head(x, params)
    assert out.shape == (B, NUM_CLASSES)
    assert jnp.allclose(out, ref, atol=1e-3, rtol=1e-3), "mismatch vs reference"

    print("KERNEL_OK")
</pallas_src>

<mosaic_0001>
module attributes {stable_mosaic.version = 11 : i64} {
  func.func @head_kernel(%arg0: i32, %arg1: i32, %arg2: memref<8x8x256xf32, #tpu.memory_space<vmem>>, %arg3: memref<1x256xf32, #tpu.memory_space<vmem>>, %arg4: memref<1x256xf32, #tpu.memory_space<vmem>>, %arg5: memref<256x128xf32, #tpu.memory_space<vmem>>, %arg6: memref<1x128xf32, #tpu.memory_space<vmem>>, %arg7: memref<1x128xf32, #tpu.memory_space<vmem>>, %arg8: memref<1x128xf32, #tpu.memory_space<vmem>>, %arg9: memref<128x128xf32, #tpu.memory_space<vmem>>, %arg10: memref<1x128xf32, #tpu.memory_space<vmem>>, %arg11: memref<8x128xf32, #tpu.memory_space<vmem>>, %arg12: memref<8x256xf32, #tpu.memory_space<vmem>>) attributes {dimension_semantics = [#tpu.dimension_semantics<parallel>, #tpu.dimension_semantics<arbitrary>], iteration_bounds = array<i64: 2, 2>, scalar_prefetch = 0 : i64, scratch_operands = 1 : i64, tpu.core_type = #tpu.core_type<tc>, window_params = [{transform_indices = @transform_0, window_bounds = array<i64: 8, 8, 256>}, {pipeline_mode = #tpu.pipeline_mode<synchronous>, transform_indices = @transform_1, window_bounds = array<i64: 1, 256>}, {pipeline_mode = #tpu.pipeline_mode<synchronous>, transform_indices = @transform_2, window_bounds = array<i64: 1, 256>}, {pipeline_mode = #tpu.pipeline_mode<synchronous>, transform_indices = @transform_3, window_bounds = array<i64: 256, 128>}, {pipeline_mode = #tpu.pipeline_mode<synchronous>, transform_indices = @transform_4, window_bounds = array<i64: 1, 128>}, {pipeline_mode = #tpu.pipeline_mode<synchronous>, transform_indices = @transform_5, window_bounds = array<i64: 1, 128>}, {pipeline_mode = #tpu.pipeline_mode<synchronous>, transform_indices = @transform_6, window_bounds = array<i64: 1, 128>}, {pipeline_mode = #tpu.pipeline_mode<synchronous>, transform_indices = @transform_7, window_bounds = array<i64: 128, 128>}, {pipeline_mode = #tpu.pipeline_mode<synchronous>, transform_indices = @transform_8, window_bounds = array<i64: 1, 128>}, {transform_indices = @transform_9, window_bounds = array<i64: 8, 128>}]} {
    %c0_i32 = arith.constant 0 : i32
    %0 = arith.cmpi eq, %arg1, %c0_i32 : i32
    %1 = arith.extui %0 : i1 to i32
    %c0_i32_0 = arith.constant 0 : i32
    %2 = arith.cmpi ne, %1, %c0_i32_0 : i32
    scf.if %2 {
      %cst = arith.constant 0xFF800000 : f32
      %33 = vector.broadcast %cst : f32 to vector<8x256xf32>
      %c0_8 = arith.constant 0 : index
      %c0_9 = arith.constant 0 : index
      %34 = vector.load %arg12[%c0_8, %c0_9] : memref<8x256xf32, #tpu.memory_space<vmem>>, vector<8x256xf32>
      tpu.vector_store %arg12[%c0_8, %c0_9], %33 {strides = array<i32>} : memref<8x256xf32, #tpu.memory_space<vmem>>, vector<8x256xf32>,
    } else {
    }
    %c0 = arith.constant 0 : index
    %c0_1 = arith.constant 0 : index
    %c0_2 = arith.constant 0 : index
    %3 = vector.load %arg2[%c0, %c0_1, %c0_2] : memref<8x8x256xf32, #tpu.memory_space<vmem>>, vector<8x8x256xf32>
    %c0_3 = arith.constant 0 : index
    %c0_4 = arith.constant 0 : index
    %4 = vector.load %arg12[%c0_3, %c0_4] : memref<8x256xf32, #tpu.memory_space<vmem>>, vector<8x256xf32>
    %5 = vector.extract_strided_slice %3 {offsets = [0, 0, 0], sizes = [8, 1, 256], strides = [1, 1, 1]} : vector<8x8x256xf32> to vector<8x1x256xf32>
    %6 = vector.shape_cast %5 : vector<8x1x256xf32> to vector<8x256xf32>
    %7 = arith.maximumf %4, %6 : vector<8x256xf32>
    %8 = vector.extract_strided_slice %3 {offsets = [0, 1, 0], sizes = [8, 1, 256], strides = [1, 1, 1]} : vector<8x8x256xf32> to vector<8x1x256xf32>
    %9 = vector.shape_cast %8 : vector<8x1x256xf32> to vector<8x256xf32>
    %10 = arith.maximumf %7, %9 : vector<8x256xf32>
    %11 = vector.extract_strided_slice %3 {offsets = [0, 2, 0], sizes = [8, 1, 256], strides = [1, 1, 1]} : vector<8x8x256xf32> to vector<8x1x256xf32>
    %12 = vector.shape_cast %11 : vector<8x1x256xf32> to vector<8x256xf32>
    %13 = arith.maximumf %10, %12 : vector<8x256xf32>
    %14 = vector.extract_strided_slice %3 {offsets = [0, 3, 0], sizes = [8, 1, 256], strides = [1, 1, 1]} : vector<8x8x256xf32> to vector<8x1x256xf32>
    %15 = vector.shape_cast %14 : vector<8x1x256xf32> to vector<8x256xf32>
    %16 = arith.maximumf %13, %15 : vector<8x256xf32>
    %17 = vector.extract_strided_slice %3 {offsets = [0, 4, 0], sizes = [8, 1, 256], strides = [1, 1, 1]} : vector<8x8x256xf32> to vector<8x1x256xf32>
    %18 = vector.shape_cast %17 : vector<8x1x256xf32> to vector<8x256xf32>
    %19 = arith.maximumf %16, %18 : vector<8x256xf32>
    %20 = vector.extract_strided_slice %3 {offsets = [0, 5, 0], sizes = [8, 1, 256], strides = [1, 1, 1]} : vector<8x8x256xf32> to vector<8x1x256xf32>
    %21 = vector.shape_cast %20 : vector<8x1x256xf32> to vector<8x256xf32>
    %22 = arith.maximumf %19, %21 : vector<8x256xf32>
    %23 = vector.extract_strided_slice %3 {offsets = [0, 6, 0], sizes = [8, 1, 256], strides = [1, 1, 1]} : vector<8x8x256xf32> to vector<8x1x256xf32>
    %24 = vector.shape_cast %23 : vector<8x1x256xf32> to vector<8x256xf32>
    %25 = arith.maximumf %22, %24 : vector<8x256xf32>
    %26 = vector.extract_strided_slice %3 {offsets = [0, 7, 0], sizes = [8, 1, 256], strides = [1, 1, 1]} : vector<8x8x256xf32> to vector<8x1x256xf32>
    %27 = vector.shape_cast %26 : vector<8x1x256xf32> to vector<8x256xf32>
    %28 = arith.maximumf %25, %27 : vector<8x256xf32>
    %c0_5 = arith.constant 0 : index
    %c0_6 = arith.constant 0 : index
    %29 = vector.load %arg12[%c0_5, %c0_6] : memref<8x256xf32, #tpu.memory_space<vmem>>, vector<8x256xf32>
    tpu.vector_store %arg12[%c0_5, %c0_6], %28 {strides = array<i32>} : memref<8x256xf32, #tpu.memory_space<vmem>>, vector<8x256xf32>,
    %c1_i32 = arith.constant 1 : i32
    %30 = arith.cmpi eq, %arg1, %c1_i32 : i32
    %31 = arith.extui %30 : i1 to i32
    %c0_i32_7 = arith.constant 0 : i32
    %32 = arith.cmpi ne, %31, %c0_i32_7 : i32
    scf.if %32 {
      %c0_8 = arith.constant 0 : index
      %c0_9 = arith.constant 0 : index
      %33 = vector.load %arg12[%c0_8, %c0_9] : memref<8x256xf32, #tpu.memory_space<vmem>>, vector<8x256xf32>
      %cst = arith.constant dense<0.000000e+00> : vector<8xf32>
      %34 = vector.multi_reduction <add>, %33, %cst [1] : vector<8x256xf32> to vector<8xf32>
      %35 = vector.shape_cast %34 : vector<8xf32> to vector<8x1xf32>
      %cst_10 = arith.constant 2.560000e+02 : f32
      %36 = vector.broadcast %cst_10 : f32 to vector<8x1xf32>
      %37 = arith.divf %35, %36 : vector<8x1xf32>
      %38 = vector.broadcast %37 : vector<8x1xf32> to vector<8x256xf32>
      %39 = arith.subf %33, %38 : vector<8x256xf32>
      %40 = arith.mulf %39, %39 : vector<8x256xf32>
      %cst_11 = arith.constant dense<0.000000e+00> : vector<8xf32>
      %41 = vector.multi_reduction <add>, %40, %cst_11 [1] : vector<8x256xf32> to vector<8xf32>
      %42 = vector.shape_cast %41 : vector<8xf32> to vector<8x1xf32>
      %cst_12 = arith.constant 2.560000e+02 : f32
      %43 = vector.broadcast %cst_12 : f32 to vector<8x1xf32>
      %44 = arith.divf %42, %43 : vector<8x1xf32>
      %cst_13 = arith.constant 9.99999974E-6 : f32
      %45 = vector.broadcast %cst_13 : f32 to vector<8x1xf32>
      %46 = arith.addf %44, %45 : vector<8x1xf32>
      %47 = math.rsqrt %46 : vector<8x1xf32>
      %48 = vector.broadcast %47 : vector<8x1xf32> to vector<8x256xf32>
      %49 = arith.mulf %39, %48 : vector<8x256xf32>
      %c0_14 = arith.constant 0 : index
      %c0_15 = arith.constant 0 : index
      %50 = vector.load %arg3[%c0_14, %c0_15] : memref<1x256xf32, #tpu.memory_space<vmem>>, vector<1x256xf32>
      %51 = vector.broadcast %50 : vector<1x256xf32> to vector<8x256xf32>
      %52 = arith.mulf %49, %51 : vector<8x256xf32>
      %c0_16 = arith.constant 0 : index
      %c0_17 = arith.constant 0 : index
      %53 = vector.load %arg4[%c0_16, %c0_17] : memref<1x256xf32, #tpu.memory_space<vmem>>, vector<1x256xf32>
      %54 = vector.broadcast %53 : vector<1x256xf32> to vector<8x256xf32>
      %55 = arith.addf %52, %54 : vector<8x256xf32>
      %cst_18 = arith.constant 0.000000e+00 : f32
      %56 = vector.broadcast %cst_18 : f32 to vector<8x256xf32>
      %57 = arith.maximumf %55, %56 : vector<8x256xf32>
      %c0_19 = arith.constant 0 : index
      %c0_20 = arith.constant 0 : index
      %58 = vector.load %arg5[%c0_19, %c0_20] : memref<256x128xf32, #tpu.memory_space<vmem>>, vector<256x128xf32>
      %cst_21 = arith.constant dense<0.000000e+00> : vector<8x128xf32>
      %59 = tpu.matmul %57, %58, %cst_21 {dimension_numbers = #tpu.dot_dimension_numbers<[1], [0], [0], [1], [0, 0, 1, 1], [], []>} : vector<8x256xf32>, vector<256x128xf32>, vector<8x128xf32> -> vector<8x128xf32>
      %c0_22 = arith.constant 0 : index
      %c0_23 = arith.constant 0 : index
      %60 = vector.load %arg6[%c0_22, %c0_23] : memref<1x128xf32, #tpu.memory_space<vmem>>, vector<1x128xf32>
      %61 = vector.broadcast %60 : vector<1x128xf32> to vector<8x128xf32>
      %62 = arith.addf %59, %61 : vector<8x128xf32>
      %cst_24 = arith.constant dense<0.000000e+00> : vector<8xf32>
      %63 = vector.multi_reduction <add>, %62, %cst_24 [1] : vector<8x128xf32> to vector<8xf32>
      %64 = vector.shape_cast %63 : vector<8xf32> to vector<8x1xf32>
      %cst_25 = arith.constant 1.280000e+02 : f32
      %65 = vector.broadcast %cst_25 : f32 to vector<8x1xf32>
      %66 = arith.divf %64, %65 : vector<8x1xf32>
      %67 = vector.broadcast %66 : vector<8x1xf32> to vector<8x128xf32>
      %68 = arith.subf %62, %67 : vector<8x128xf32>
      %69 = arith.mulf %68, %68 : vector<8x128xf32>
      %cst_26 = arith.constant dense<0.000000e+00> : vector<8xf32>
      %70 = vector.multi_reduction <add>, %69, %cst_26 [1] : vector<8x128xf32> to vector<8xf32>
      %71 = vector.shape_cast %70 : vector<8xf32> to vector<8x1xf32>
      %cst_27 = arith.constant 1.280000e+02 : f32
      %72 = vector.broadcast %cst_27 : f32 to vector<8x1xf32>
      %73 = arith.divf %71, %72 : vector<8x1xf32>
      %cst_28 = arith.constant 9.99999974E-6 : f32
      %74 = vector.broadcast %cst_28 : f32 to vector<8x1xf32>
      %75 = arith.addf %73, %74 : vector<8x1xf32>
      %76 = math.rsqrt %75 : vector<8x1xf32>
      %77 = vector.broadcast %76 : vector<8x1xf32> to vector<8x128xf32>
      %78 = arith.mulf %68, %77 : vector<8x128xf32>
      %c0_29 = arith.constant 0 : index
      %c0_30 = arith.constant 0 : index
      %79 = vector.load %arg7[%c0_29, %c0_30] : memref<1x128xf32, #tpu.memory_space<vmem>>, vector<1x128xf32>
      %80 = vector.broadcast %79 : vector<1x128xf32> to vector<8x128xf32>
      %81 = arith.mulf %78, %80 : vector<8x128xf32>
      %c0_31 = arith.constant 0 : index
      %c0_32 = arith.constant 0 : index
      %82 = vector.load %arg8[%c0_31, %c0_32] : memref<1x128xf32, #tpu.memory_space<vmem>>, vector<1x128xf32>
      %83 = vector.broadcast %82 : vector<1x128xf32> to vector<8x128xf32>
      %84 = arith.addf %81, %83 : vector<8x128xf32>
      %cst_33 = arith.constant 0.000000e+00 : f32
      %85 = vector.broadcast %cst_33 : f32 to vector<8x128xf32>
      %86 = arith.maximumf %84, %85 : vector<8x128xf32>
      %c0_34 = arith.constant 0 : index
      %c0_35 = arith.constant 0 : index
      %87 = vector.load %arg9[%c0_34, %c0_35] : memref<128x128xf32, #tpu.memory_space<vmem>>, vector<128x128xf32>
      %cst_36 = arith.constant dense<0.000000e+00> : vector<8x128xf32>
      %88 = tpu.matmul %86, %87, %cst_36 {dimension_numbers = #tpu.dot_dimension_numbers<[1], [0], [0], [1], [0, 0, 1, 1], [], []>} : vector<8x128xf32>, vector<128x128xf32>, vector<8x128xf32> -> vector<8x128xf32>
      %c0_37 = arith.constant 0 : index
      %c0_38 = arith.constant 0 : index
      %89 = vector.load %arg10[%c0_37, %c0_38] : memref<1x128xf32, #tpu.memory_space<vmem>>, vector<1x128xf32>
      %90 = vector.broadcast %89 : vector<1x128xf32> to vector<8x128xf32>
      %91 = arith.addf %88, %90 : vector<8x128xf32>
      %c0_39 = arith.constant 0 : index
      %c0_40 = arith.constant 0 : index
      %92 = vector.load %arg11[%c0_39, %c0_40] : memref<8x128xf32, #tpu.memory_space<vmem>>, vector<8x128xf32>
      tpu.vector_store %arg11[%c0_39, %c0_40], %91 {strides = array<i32>} : memref<8x128xf32, #tpu.memory_space<vmem>>, vector<8x128xf32>,
    } else {
    }
    return
  }
  func.func @transform_0(%arg0: i32, %arg1: i32) -> (i32, i32, i32) {
    %c0_i32 = arith.constant 0 : i32
    %c0_i32_0 = arith.constant 0 : i32
    return %arg0, %arg1, %c0_i32 : i32, i32, i32
  }
  func.func @transform_1(%arg0: i32, %arg1: i32) -> (i32, i32) {
    %c0_i32 = arith.constant 0 : i32
    %c0_i32_0 = arith.constant 0 : i32
    %c0_i32_1 = arith.constant 0 : i32
    return %c0_i32, %c0_i32_0 : i32, i32
  }
  func.func @transform_2(%arg0: i32, %arg1: i32) -> (i32, i32) {
    %c0_i32 = arith.constant 0 : i32
    %c0_i32_0 = arith.constant 0 : i32
    %c0_i32_1 = arith.constant 0 : i32
    return %c0_i32, %c0_i32_0 : i32, i32
  }
  func.func @transform_3(%arg0: i32, %arg1: i32) -> (i32, i32) {
    %c0_i32 = arith.constant 0 : i32
    %c0_i32_0 = arith.constant 0 : i32
    %c0_i32_1 = arith.constant 0 : i32
    return %c0_i32, %c0_i32_0 : i32, i32
  }
  func.func @transform_4(%arg0: i32, %arg1: i32) -> (i32, i32) {
    %c0_i32 = arith.constant 0 : i32
    %c0_i32_0 = arith.constant 0 : i32
    %c0_i32_1 = arith.constant 0 : i32
    return %c0_i32, %c0_i32_0 : i32, i32
  }
  func.func @transform_5(%arg0: i32, %arg1: i32) -> (i32, i32) {
    %c0_i32 = arith.constant 0 : i32
    %c0_i32_0 = arith.constant 0 : i32
    %c0_i32_1 = arith.constant 0 : i32
    return %c0_i32, %c0_i32_0 : i32, i32
  }
  func.func @transform_6(%arg0: i32, %arg1: i32) -> (i32, i32) {
    %c0_i32 = arith.constant 0 : i32
    %c0_i32_0 = arith.constant 0 : i32
    %c0_i32_1 = arith.constant 0 : i32
    return %c0_i32, %c0_i32_0 : i32, i32
  }
  func.func @transform_7(%arg0: i32, %arg1: i32) -> (i32, i32) {
    %c0_i32 = arith.constant 0 : i32
    %c0_i32_0 = arith.constant 0 : i32
    %c0_i32_1 = arith.constant 0 : i32
    return %c0_i32, %c0_i32_0 : i32, i32
  }
  func.func @transform_8(%arg0: i32, %arg1: i32) -> (i32, i32) {
    %c0_i32 = arith.constant 0 : i32
    %c0_i32_0 = arith.constant 0 : i32
    %c0_i32_1 = arith.constant 0 : i32
    return %c0_i32, %c0_i32_0 : i32, i32
  }
  func.func @transform_9(%arg0: i32, %arg1: i32) -> (i32, i32) {
    %c0_i32 = arith.constant 0 : i32
    %c0_i32_0 = arith.constant 0 : i32
    return %arg0, %c0_i32 : i32, i32
  }
}

</mosaic_0001>

<llo_original>
// kernel: tpu_custom_call.1
$region0: #{tpu_custom_call.1}
  #allocation0 [shape = 'u32[]', space=smem, size = 0x4, offset = 0x4, fixed_abs, tag = 'smem constant byte address 0x4 - core index']
  #allocation1 [shape = 'u32[144,128]{1,0:T(1,128)}', space=vmem, size = 0x12000, scoped, tag = 'internal scratch']
  #allocation2 [shape = 'f32[8,256]{1,0:T(8,128)}', space=vmem, size = 0x2000, scoped, tag = 'scratch operand']
  %s0 = inlined_call_operand.hbm [shape: f32[16,16,256], index: 0, kind: input, shape index: {}]
  %s1 = inlined_call_operand.vmem [shape: f32[1,256], index: 1, kind: input, shape index: {}]
  %s2 = inlined_call_operand.vmem [shape: f32[1,256], index: 2, kind: input, shape index: {}]
  %s3 = inlined_call_operand.hbm [shape: f32[256,128], index: 3, kind: input, shape index: {}]
  %s4 = inlined_call_operand.vmem [shape: f32[1,128], index: 4, kind: input, shape index: {}]
  %s5 = inlined_call_operand.vmem [shape: f32[1,128], index: 5, kind: input, shape index: {}]
  %s6 = inlined_call_operand.vmem [shape: f32[1,128], index: 6, kind: input, shape index: {}]
  %s7 = inlined_call_operand.hbm [shape: f32[128,128], index: 7, kind: input, shape index: {}]
  %s8 = inlined_call_operand.vmem [shape: f32[1,128], index: 8, kind: input, shape index: {}]
  %s9 = inlined_call_operand.hbm [shape: f32[16,128], index: 9, kind: output, shape index: {}]
  %s10 = sld [smem:[#allocation0]]
  $region89: #{tpu_custom_call.1} parent=0
    _
  %s12 = ssub.s32 1, %s10
  %s13 = scalar_select 0, %s12, %s10
  $region1: #{tpu_custom_call.1} parent=0
    #allocation3 [shape = 'u8[131072]{0}', space=vmem, size = 0x20000, scoped, tag = 'input window, operand 0']
    #allocation4 [shape = 's32[2]{0}', space=sflag, size = 0x8, scoped, tag = 'scoped memory for tpu_custom_call.1']
    #allocation5 [shape = 's32[2]{0}', space=sflag, size = 0x8, scoped, tag = 'scoped memory for tpu_custom_call.1']
    #allocation6 [shape = 'u8[131072]{0}', space=vmem, size = 0x20000, scoped, tag = 'input window, operand 3, single buffered']
    #allocation7 [shape = 's32[1]{0}', space=sflag, size = 0x4, scoped, tag = 'scoped memory for tpu_custom_call.1']
    #allocation8 [shape = 'u8[65536]{0}', space=vmem, size = 0x10000, scoped, tag = 'input window, operand 7, single buffered']
    #allocation9 [shape = 'u8[8192]{0}', space=vmem, size = 0x2000, scoped, tag = 'output window, operand 0']
    %14 = vsyncpa [#allocation4], 0
    %s15 = scalar_lea.sflag [#allocation4], 1
    %16 = vsyncpa %s15, 0
    %17 = vsyncpa [#allocation7], 0
    %18 = vsyncpa [#allocation5], 0
    %s19 = scalar_lea.sflag [#allocation5], 1
    %20 = vsyncpa %s19, 0
    loop: start=0, step=1, limit=6
    $region2: #{tpu_custom_call.1} parent=1 // loop_pre_header
      _
    $region3: #{tpu_custom_call.1} parent=1 // loop_header
      %s22 = sphi 0, %s26
      %p23 = scmp.ge.s32.totalorder %s22, 6
      %s29 = sphi 0, %s41
      %s30 = sphi 0, %s37
      %s31 = sphi 0, %s29
      %s32 = sphi 0, %s30
      %s33 = sphi 0, %s31
      %s34 = sphi 0, %s32
      %s46 = sphi 0, %s48
      %s49 = sphi 0, %s46
      %s50 = sphi 0, %s49
      %s66 = sphi 0, %s50
      %s70 = sphi 0, %s70
      %s72 = sphi 0, %s70
      %s73 = sphi 0, %s72
      %s87 = sphi 0, %s73
      %s91 = sphi 0, %s91
      %s93 = sphi 0, %s91
      %s94 = sphi 0, %s93
      %s108 = sphi 0, %s94
      %s112 = sphi 0, %s112
      %s114 = sphi 0, %s112
      %s115 = sphi 0, %s114
      %s129 = sphi 0, %s115
      %s133 = sphi 0, %s133
      %s135 = sphi 0, %s133
      %s136 = sphi 0, %s135
      %s150 = sphi 0, %s136
      %s154 = sphi 0, %s154
      %s156 = sphi 0, %s154
      %s157 = sphi 0, %s156
      %s171 = sphi 0, %s157
      %s175 = sphi 0, %s175
      %s177 = sphi 0, %s175
      %s178 = sphi 0, %s177
      %s192 = sphi 0, %s178
      %s196 = sphi 0, %s196
      %s198 = sphi 0, %s196
      %s199 = sphi 0, %s198
      %s213 = sphi 0, %s199
      %s217 = sphi 0, %s217
      %s219 = sphi 0, %s217
      %s220 = sphi 0, %s219
      %s234 = sphi 0, %s220
      %s240 = sphi 0, %s242
      %s243 = sphi 0, %s240
      %s244 = sphi 0, %s243
      %s260 = sphi 0, %s244
    $region4: #{tpu_custom_call.1} parent=1 // loop_header_branch
      %25 = sbr.rel (%p23) target = $region8
    $region5: #{tpu_custom_call.1} parent=1 // loop_body
      %s27 = ssub.s32 %s22, 1
      %s28 = ssub.s32 %s22, 2
      %s35 = sadd.s32 1, %s30
      %p36 = scmp.ge.s32.totalorder %s35, 2
      %s37 = scalar_select %p36, 0, %s35
      %s38 = sadd.s32 1, %s29
      %s39 = scalar_select %p36, %s38, %s29
      %p40 = scmp.ge.s32.totalorder %s39, 2
      %s41 = scalar_select %p40, 0, %s39
      %s42 = ssub.s32 %s29, %s41
      %s43 = ssub.s32 %s30, %s37
      %s44 = sor.u32 %s42, %s43
      %p45 = scmp.eq.s32.totalorder %s44, 0
      %s47 = sadd.s32 %s46, 1
      %s48 = scalar_select %p45, %s46, %s47
      %p51 = pneg %p45
      %p52 = scmp.eq.s32.totalorder %s22, 3
      %p53 = por %p51, %p52
      %p54 = scmp.ne.s32.totalorder %s46, %s49
      %p55 = scmp.eq.s32.totalorder %s22, 0
      %p56 = por %p54, %p55
      %p57 = scmp.ne.s32.totalorder %s46, %s49
      %p58 = scmp.eq.s32.totalorder %s27, 3
      %p59 = por %p57, %p58
      %p60 = scmp.ne.s32.totalorder %s49, %s50
      %p61 = scmp.eq.s32.totalorder %s27, 0
      %p62 = por %p60, %p61
      %p63 = scmp.ne.s32.totalorder %s49, %s50
      %p64 = scmp.eq.s32.totalorder %s28, 3
      %p65 = por %p63, %p64
      %p67 = scmp.ne.s32.totalorder %s50, %s66
      %p68 = scmp.eq.s32.totalorder %s28, 0
      %p69 = por %p67, %p68
      %s71 = sadd.s32 %s70, 1
      %p74 = scmp.eq.s32.totalorder %s22, 3
      %p75 = scmp.ne.s32.totalorder %s70, %s72
      %p76 = scmp.eq.s32.totalorder %s22, 0
      %p77 = por %p75, %p76
      %p78 = scmp.ne.s32.totalorder %s70, %s72
      %p79 = scmp.eq.s32.totalorder %s27, 3
      %p80 = por %p78, %p79
      %p81 = scmp.ne.s32.totalorder %s72, %s73
      %p82 = scmp.eq.s32.totalorder %s27, 0
      %p83 = por %p81, %p82
      %p84 = scmp.ne.s32.totalorder %s72, %s73
      %p85 = scmp.eq.s32.totalorder %s28, 3
      %p86 = por %p84, %p85
      %p88 = scmp.ne.s32.totalorder %s73, %s87
      %p89 = scmp.eq.s32.totalorder %s28, 0
      %p90 = por %p88, %p89
      %s92 = sadd.s32 %s91, 1
      %p95 = scmp.eq.s32.totalorder %s22, 3
      %p96 = scmp.ne.s32.totalorder %s91, %s93
      %p97 = scmp.eq.s32.totalorder %s22, 0
      %p98 = por %p96, %p97
      %p99 = scmp.ne.s32.totalorder %s91, %s93
      %p100 = scmp.eq.s32.totalorder %s27, 3
      %p101 = por %p99, %p100
      %p102 = scmp.ne.s32.totalorder %s93, %s94
      %p103 = scmp.eq.s32.totalorder %s27, 0
      %p104 = por %p102, %p103
      %p105 = scmp.ne.s32.totalorder %s93, %s94
      %p106 = scmp.eq.s32.totalorder %s28, 3
      %p107 = por %p105, %p106
      %p109 = scmp.ne.s32.totalorder %s94, %s108
      %p110 = scmp.eq.s32.totalorder %s28, 0
      %p111 = por %p109, %p110
      %s113 = sadd.s32 %s112, 1
      %p116 = scmp.eq.s32.totalorder %s22, 3
      %p117 = scmp.ne.s32.totalorder %s112, %s114
      %p118 = scmp.eq.s32.totalorder %s22, 0
      %p119 = por %p117, %p118
      %p120 = scmp.ne.s32.totalorder %s112, %s114
      %p121 = scmp.eq.s32.totalorder %s27, 3
      %p122 = por %p120, %p121
      %p123 = scmp.ne.s32.totalorder %s114, %s115
      %p124 = scmp.eq.s32.totalorder %s27, 0
      %p125 = por %p123, %p124
      %p126 = scmp.ne.s32.totalorder %s114, %s115
      %p127 = scmp.eq.s32.totalorder %s28, 3
      %p128 = por %p126, %p127
      %p130 = scmp.ne.s32.totalorder %s115, %s129
      %p131 = scmp.eq.s32.totalorder %s28, 0
      %p132 = por %p130, %p131
      %s134 = sadd.s32 %s133, 1
      %p137 = scmp.eq.s32.totalorder %s22, 3
      %p138 = scmp.ne.s32.totalorder %s133, %s135
      %p139 = scmp.eq.s32.totalorder %s22, 0
      %p140 = por %p138, %p139
      %p141 = scmp.ne.s32.totalorder %s133, %s135
      %p142 = scmp.eq.s32.totalorder %s27, 3
      %p143 = por %p141, %p142
      %p144 = scmp.ne.s32.totalorder %s135, %s136
      %p145 = scmp.eq.s32.totalorder %s27, 0
      %p146 = por %p144, %p145
      %p147 = scmp.ne.s32.totalorder %s135, %s136
      %p148 = scmp.eq.s32.totalorder %s28, 3
      %p149 = por %p147, %p148
      %p151 = scmp.ne.s32.totalorder %s136, %s150
      %p152 = scmp.eq.s32.totalorder %s28, 0
      %p153 = por %p151, %p152
      %s155 = sadd.s32 %s154, 1
      %p158 = scmp.eq.s32.totalorder %s22, 3
      %p159 = scmp.ne.s32.totalorder %s154, %s156
      %p160 = scmp.eq.s32.totalorder %s22, 0
      %p161 = por %p159, %p160
      %p162 = scmp.ne.s32.totalorder %s154, %s156
      %p163 = scmp.eq.s32.totalorder %s27, 3
      %p164 = por %p162, %p163
      %p165 = scmp.ne.s32.totalorder %s156, %s157
      %p166 = scmp.eq.s32.totalorder %s27, 0
      %p167 = por %p165, %p166
      %p168 = scmp.ne.s32.totalorder %s156, %s157
      %p169 = scmp.eq.s32.totalorder %s28, 3
      %p170 = por %p168, %p169
      %p172 = scmp.ne.s32.totalorder %s157, %s171
      %p173 = scmp.eq.s32.totalorder %s28, 0
      %p174 = por %p172, %p173
      %s176 = sadd.s32 %s175, 1
      %p179 = scmp.eq.s32.totalorder %s22, 3
      %p180 = scmp.ne.s32.totalorder %s175, %s177
      %p181 = scmp.eq.s32.totalorder %s22, 0
      %p182 = por %p180, %p181
      %p183 = scmp.ne.s32.totalorder %s175, %s177
      %p184 = scmp.eq.s32.totalorder %s27, 3
      %p185 = por %p183, %p184
      %p186 = scmp.ne.s32.totalorder %s177, %s178
      %p187 = scmp.eq.s32.totalorder %s27, 0
      %p188 = por %p186, %p187
      %p189 = scmp.ne.s32.totalorder %s177, %s178
      %p190 = scmp.eq.s32.totalorder %s28, 3
      %p191 = por %p189, %p190
      %p193 = scmp.ne.s32.totalorder %s178, %s192
      %p194 = scmp.eq.s32.totalorder %s28, 0
      %p195 = por %p193, %p194
      %s197 = sadd.s32 %s196, 1
      %p200 = scmp.eq.s32.totalorder %s22, 3
      %p201 = scmp.ne.s32.totalorder %s196, %s198
      %p202 = scmp.eq.s32.totalorder %s22, 0
      %p203 = por %p201, %p202
      %p204 = scmp.ne.s32.totalorder %s196, %s198
      %p205 = scmp.eq.s32.totalorder %s27, 3
      %p206 = por %p204, %p205
      %p207 = scmp.ne.s32.totalorder %s198, %s199
      %p208 = scmp.eq.s32.totalorder %s27, 0
      %p209 = por %p207, %p208
      %p210 = scmp.ne.s32.totalorder %s198, %s199
      %p211 = scmp.eq.s32.totalorder %s28, 3
      %p212 = por %p210, %p211
      %p214 = scmp.ne.s32.totalorder %s199, %s213
      %p215 = scmp.eq.s32.totalorder %s28, 0
      %p216 = por %p214, %p215
      %s218 = sadd.s32 %s217, 1
      %p221 = scmp.eq.s32.totalorder %s22, 3
      %p222 = scmp.ne.s32.totalorder %s217, %s219
      %p223 = scmp.eq.s32.totalorder %s22, 0
      %p224 = por %p222, %p223
      %p225 = scmp.ne.s32.totalorder %s217, %s219
      %p226 = scmp.eq.s32.totalorder %s27, 3
      %p227 = por %p225, %p226
      %p228 = scmp.ne.s32.totalorder %s219, %s220
      %p229 = scmp.eq.s32.totalorder %s27, 0
      %p230 = por %p228, %p229
      %p231 = scmp.ne.s32.totalorder %s219, %s220
      %p232 = scmp.eq.s32.totalorder %s28, 3
      %p233 = por %p231, %p232
      %p235 = scmp.ne.s32.totalorder %s220, %s234
      %p236 = scmp.eq.s32.totalorder %s28, 0
      %p237 = por %p235, %p236
      %s238 = ssub.s32 %s29, %s41
      %p239 = scmp.eq.s32.totalorder %s238, 0
      %s241 = sadd.s32 %s240, 1
      %s242 = scalar_select %p239, %s240, %s241
      %p245 = pneg %p239
      %p246 = scmp.eq.s32.totalorder %s22, 3
      %p247 = por %p245, %p246
      %p248 = scmp.ne.s32.totalorder %s240, %s243
      %p249 = scmp.eq.s32.totalorder %s22, 0
      %p250 = por %p248, %p249
      %p251 = scmp.ne.s32.totalorder %s240, %s243
      %p252 = scmp.eq.s32.totalorder %s27, 3
      %p253 = por %p251, %p252
      %p254 = scmp.ne.s32.totalorder %s243, %s244
      %p255 = scmp.eq.s32.totalorder %s27, 0
      %p256 = por %p254, %p255
      %p257 = scmp.ne.s32.totalorder %s243, %s244
      %p258 = scmp.eq.s32.totalorder %s28, 3
      %p259 = por %p257, %p258
      %p261 = scmp.ne.s32.totalorder %s244, %s260
      %p262 = scmp.eq.s32.totalorder %s28, 0
      %p263 = por %p261, %p262
      %p264 = scmp.le.s32.totalorder 1, %s22
      %p265 = scmp.lt.s32.totalorder %s22, 5
      %p266 = pnand %p264, %p265
      %p267 = pneg %p266
      // Predicated region
      $region9: #{tpu_custom_call.1} parent=5 // pred_check
        _
      $region10: #{tpu_custom_call.1} parent=5 // pred_check_branch
        %269 = sbr.rel (%p266) target = $region12
      $region11: #{tpu_custom_call.1} parent=5 // pred_region
        %s270 = ssub.s32 %s22, 1
        // Predicated region
        $region13: #{tpu_custom_call.1} parent=11 // pred_check
          %p271 = pneg %p83
        $region14: #{tpu_custom_call.1} parent=11 // pred_check_branch
          %273 = sbr.rel (%p271) target = $region16
        $region15: #{tpu_custom_call.1} parent=11 // pred_region
          _
        $region16: #{tpu_custom_call.1} parent=11 // pred_fallthru
          _
        // Predicated region
        $region17: #{tpu_custom_call.1} parent=11 // pred_check
          %p274 = pneg %p104
        $region18: #{tpu_custom_call.1} parent=11 // pred_check_branch
          %276 = sbr.rel (%p274) target = $region20
        $region19: #{tpu_custom_call.1} parent=11 // pred_region
          _
        $region20: #{tpu_custom_call.1} parent=11 // pred_fallthru
          _
        // Predicated region
        $region21: #{tpu_custom_call.1} parent=11 // pred_check
          %p277 = pneg %p125
        $region22: #{tpu_custom_call.1} parent=11 // pred_check_branch
          %279 = sbr.rel (%p277) target = $region24
        $region23: #{tpu_custom_call.1} parent=11 // pred_region
          %s281 = ssub.s32 4096, 4096
          %282 = vsyncadd [#allocation7], %s281
          %s283 = sshll.u32 [#allocation6], 4
          %s284 = int_to_ptr.vmem [resolvable:$true] %s283
          %289 = dma.hbm_to_vmem [thread:$0]  %s3, 4096, %s284, [#allocation7], 128, 128, 8
        $region24: #{tpu_custom_call.1} parent=11 // pred_fallthru
          _
        // Predicated region
        $region25: #{tpu_custom_call.1} parent=11 // pred_check
          %p290 = pneg %p146
        $region26: #{tpu_custom_call.1} parent=11 // pred_check_branch
          %292 = sbr.rel (%p290) target = $region28
        $region27: #{tpu_custom_call.1} parent=11 // pred_region
          _
        $region28: #{tpu_custom_call.1} parent=11 // pred_fallthru
          _
        // Predicated region
        $region29: #{tpu_custom_call.1} parent=11 // pred_check
          %p293 = pneg %p167
        $region30: #{tpu_custom_call.1} parent=11 // pred_check_branch
          %295 = sbr.rel (%p293) target = $region32
        $region31: #{tpu_custom_call.1} parent=11 // pred_region
          _
        $region32: #{tpu_custom_call.1} parent=11 // pred_fallthru
          _
        // Predicated region
        $region33: #{tpu_custom_call.1} parent=11 // pred_check
          %p296 = pneg %p188
        $region34: #{tpu_custom_call.1} parent=11 // pred_check_branch
          %298 = sbr.rel (%p296) target = $region36
        $region35: #{tpu_custom_call.1} parent=11 // pred_region
          _
        $region36: #{tpu_custom_call.1} parent=11 // pred_fallthru
          _
        // Predicated region
        $region37: #{tpu_custom_call.1} parent=11 // pred_check
          %p299 = pneg %p209
        $region38: #{tpu_custom_call.1} parent=11 // pred_check_branch
          %301 = sbr.rel (%p299) target = $region40
        $region39: #{tpu_custom_call.1} parent=11 // pred_region
          %s303 = ssub.s32 2048, 2048
          %304 = vsyncadd [#allocation7], %s303
          %s305 = sshll.u32 [#allocation8], 4
          %s306 = int_to_ptr.vmem [resolvable:$true] %s305
          %311 = dma.hbm_to_vmem [thread:$0]  %s7, 2048, %s306, [#allocation7], 128, 128, 8
        $region40: #{tpu_custom_call.1} parent=11 // pred_fallthru
          _
        // Predicated region
        $region41: #{tpu_custom_call.1} parent=11 // pred_check
          %p312 = pneg %p230
        $region42: #{tpu_custom_call.1} parent=11 // pred_check_branch
          %314 = sbr.rel (%p312) target = $region44
        $region43: #{tpu_custom_call.1} parent=11 // pred_region
          _
        $region44: #{tpu_custom_call.1} parent=11 // pred_fallthru
          _
      $region12: #{tpu_custom_call.1} parent=5 // pred_fallthru
        _
      %p315 = scmp.lt.s32.totalorder %s22, 4
      // Predicated region
      $region45: #{tpu_custom_call.1} parent=5 // pred_check
        %p316 = pneg %p315
      $region46: #{tpu_custom_call.1} parent=5 // pred_check_branch
        %318 = sbr.rel (%p316) target = $region48
      $region47: #{tpu_custom_call.1} parent=5 // pred_region
        // Predicated region
        $region49: #{tpu_custom_call.1} parent=47 // pred_check
          %p319 = pneg %p56
        $region50: #{tpu_custom_call.1} parent=47 // pred_check_branch
          %321 = sbr.rel (%p319) target = $region52
        $region51: #{tpu_custom_call.1} parent=47 // pred_region
          %s322 = sand.u32 %s46, 1
          %s323 = scalar_lea.sflag [#allocation4], %s322
          %s324 = sand.u32 %s46, 1
          %s325 = smul.addr %s324, 128
          %s326 = scalar_lea.vmem [#allocation3], %s325
          %s327 = smul.u32 8, %s29
          %s329 = ssub.s32 2048, 2048
          %330 = vsyncadd %s323, %s329
          %s331 = smul.addr %s30, 2
          %s332 = smul.addr %s327, 4
          %s333 = sadd.s32 %s331, %s332
          %s334 = smul.addr %s333, 128
          %s335 = scalar_lea.hbm %s0, %s334
          %s336 = sshll.u32 %s326, 4
          %s337 = int_to_ptr.vmem [resolvable:$true] %s336
          %342 = dma.hbm_to_vmem [thread:$0]  %s335, 2048, %s337, %s323, 512, 256, 16
        $region52: #{tpu_custom_call.1} parent=47 // pred_fallthru
          _
      $region48: #{tpu_custom_call.1} parent=5 // pred_fallthru
        _
      %p343 = scmp.le.s32.totalorder 1, %s22
      %p344 = scmp.lt.s32.totalorder %s22, 5
      %p345 = pnand %p343, %p344
      %p346 = pneg %p345
      // Predicated region
      $region53: #{tpu_custom_call.1} parent=5 // pred_check
        _
      $region54: #{tpu_custom_call.1} parent=5 // pred_check_branch
        %348 = sbr.rel (%p345) target = $region56
      $region55: #{tpu_custom_call.1} parent=5 // pred_region
        %s349 = ssub.s32 %s22, 1
        %s350 = sand.u32 %s49, 1
        %s351 = scalar_lea.sflag [#allocation4], %s350
        %s352 = sand.u32 %s49, 1
        %s353 = smul.addr %s352, 128
        %s354 = scalar_lea.vmem [#allocation3], %s353
        // Predicated region
        $region57: #{tpu_custom_call.1} parent=55 // pred_check
          %p355 = pneg %p62
        $region58: #{tpu_custom_call.1} parent=55 // pred_check_branch
          %357 = sbr.rel (%p355) target = $region60
        $region59: #{tpu_custom_call.1} parent=55 // pred_region
          %358 = dma.done %s351, 2048
        $region60: #{tpu_custom_call.1} parent=55 // pred_fallthru
          _
        // Predicated region
        $region61: #{tpu_custom_call.1} parent=55 // pred_check
          %p359 = pneg %p125
        $region62: #{tpu_custom_call.1} parent=55 // pred_check_branch
          %361 = sbr.rel (%p359) target = $region64
        $region63: #{tpu_custom_call.1} parent=55 // pred_region
          %362 = dma.done [#allocation7], 4096
        $region64: #{tpu_custom_call.1} parent=55 // pred_fallthru
          _
        // Predicated region
        $region65: #{tpu_custom_call.1} parent=55 // pred_check
          %p363 = pneg %p209
        $region66: #{tpu_custom_call.1} parent=55 // pred_check_branch
          %365 = sbr.rel (%p363) target = $region68
        $region67: #{tpu_custom_call.1} parent=55 // pred_region
          %366 = dma.done [#allocation7], 2048
        $region68: #{tpu_custom_call.1} parent=55 // pred_fallthru
          _
        %s367 = sand.u32 %s49, 1
        %s368 = scalar_lea.sflag [#allocation4], %s367
        %s369 = sand.u32 %s49, 1
        %s370 = smul.addr %s369, 128
        %s371 = scalar_lea.vmem [#allocation3], %s370
        %p372 = pneg %p62
        %p373 = pneg %p59
        %p374 = pneg %p83
        %p375 = pneg %p80
        %p376 = pneg %p104
        %p377 = pneg %p101
        %p378 = pneg %p125
        %p379 = pneg %p122
        %p380 = pneg %p146
        %p381 = pneg %p143
        %p382 = pneg %p167
        %p383 = pneg %p164
        %p384 = pneg %p188
        %p385 = pneg %p185
        %p386 = pneg %p209
        %p387 = pneg %p206
        %p388 = pneg %p230
        %p389 = pneg %p227
        %p390 = pneg %p256
        %p391 = pneg %p253
        %s392 = sand.u32 %s243, 1
        %s393 = scalar_lea.sflag [#allocation5], %s392
        %s394 = sand.u32 %s243, 1
        %s395 = smul.addr %s394, 8
        %s396 = scalar_lea.vmem [#allocation9], %s395
        %s397 = smul.u32 8, %s31
        %p398 = scmp.eq.s32.totalorder %s32, 0
        // Predicated region
        $region69: #{tpu_custom_call.1} parent=55 // pred_check
          %p399 = pneg %p398
        $region70: #{tpu_custom_call.1} parent=55 // pred_check_branch
          %401 = sbr.rel (%p399) target = $region72
        $region71: #{tpu_custom_call.1} parent=55 // pred_region
          %402 = vst [vmem:[#allocation2] sm:$0xff] -inf
          %403 = vst [vmem:[#allocation2 + $0x8] sm:$0xff] -inf
        $region72: #{tpu_custom_call.1} parent=55 // pred_fallthru
          _
        %v404 = vld [vmem:[%s354] sm:$0xff]
        %v405 = vld [vmem:[%s354 + $0x8] sm:$0xff]
        %v406 = vld [vmem:[%s354 + $0x10] sm:$0xff]
        %v407 = vld [vmem:[%s354 + $0x18] sm:$0xff]
        %v408 = vld [vmem:[%s354 + $0x20] sm:$0xff]
        %v409 = vld [vmem:[%s354 + $0x28] sm:$0xff]
        %v410 = vld [vmem:[%s354 + $0x30] sm:$0xff]
        %v411 = vld [vmem:[%s354 + $0x38] sm:$0xff]
        %v412 = vld [vmem:[%s354 + $0x40] sm:$0xff]
        %v413 = vld [vmem:[%s354 + $0x48] sm:$0xff]
        %v414 = vld [vmem:[%s354 + $0x50] sm:$0xff]
        %v415 = vld [vmem:[%s354 + $0x58] sm:$0xff]
        %v416 = vld [vmem:[%s354 + $0x60] sm:$0xff]
        %v417 = vld [vmem:[%s354 + $0x68] sm:$0xff]
        %v418 = vld [vmem:[%s354 + $0x70] sm:$0xff]
        %v419 = vld [vmem:[%s354 + $0x78] sm:$0xff]
        %v420 = vld [vmem:[#allocation2] sm:$0xff]
        %v421 = vld [vmem:[#allocation2 + $0x8] sm:$0xff]
        %v438 = vrot.slane %v406, 7
        %vm439 = vcmask 1041409
        %v440 = vsel %vm439, %v438, %v404
        %v441 = vrot.slane %v408, 6
        %vm442 = vcmask 1042434
        %v443 = vsel %vm442, %v441, %v440
        %v444 = vrot.slane %v410, 5
        %vm445 = vcmask 1043459
        %v446 = vsel %vm445, %v444, %v443
        %v447 = vrot.slane %v412, 4
        %vm448 = vcmask 1044484
        %v449 = vsel %vm448, %v447, %v446
        %v450 = vrot.slane %v414, 3
        %vm451 = vcmask 1045509
        %v452 = vsel %vm451, %v450, %v449
        %v453 = vrot.slane %v416, 2
        %vm454 = vcmask 1046534
        %v455 = vsel %vm454, %v453, %v452
        %v456 = vrot.slane %v418, 1
        %vm457 = vcmask 1047559
        %v458 = vsel %vm457, %v456, %v455
        %v459 = vrot.slane %v407, 7
        %v460 = vsel %vm439, %v459, %v405
        %v461 = vrot.slane %v409, 6
        %v462 = vsel %vm442, %v461, %v460
        %v463 = vrot.slane %v411, 5
        %v464 = vsel %vm445, %v463, %v462
        %v465 = vrot.slane %v413, 4
        %v466 = vsel %vm448, %v465, %v464
        %v467 = vrot.slane %v415, 3
        %v468 = vsel %vm451, %v467, %v466
        %v469 = vrot.slane %v417, 2
        %v470 = vsel %vm454, %v469, %v468
        %v471 = vrot.slane %v419, 1
        %v472 = vsel %vm457, %v471, %v470
        %v475 = vmax.f32 %v420, %v458
        %v476 = vmax.f32 %v421, %v472
        %v477 = vrot.slane %v404, 1
        %v478 = vsel %vm439, %v406, %v477
        %v479 = vrot.slane %v408, 7
        %v480 = vsel %vm442, %v479, %v478
        %v481 = vrot.slane %v410, 6
        %v482 = vsel %vm445, %v481, %v480
        %v483 = vrot.slane %v412, 5
        %v484 = vsel %vm448, %v483, %v482
        %v485 = vrot.slane %v414, 4
        %v486 = vsel %vm451, %v485, %v484
        %v487 = vrot.slane %v416, 3
        %v488 = vsel %vm454, %v487, %v486
        %v489 = vrot.slane %v418, 2
        %v490 = vsel %vm457, %v489, %v488
        %v491 = vrot.slane %v405, 1
        %v492 = vsel %vm439, %v407, %v491
        %v493 = vrot.slane %v409, 7
        %v494 = vsel %vm442, %v493, %v492
        %v495 = vrot.slane %v411, 6
        %v496 = vsel %vm445, %v495, %v494
        %v497 = vrot.slane %v413, 5
        %v498 = vsel %vm448, %v497, %v496
        %v499 = vrot.slane %v415, 4
        %v500 = vsel %vm451, %v499, %v498
        %v501 = vrot.slane %v417, 3
        %v502 = vsel %vm454, %v501, %v500
        %v503 = vrot.slane %v419, 2
        %v504 = vsel %vm457, %v503, %v502
        %v507 = vmax.f32 %v475, %v490
        %v508 = vmax.f32 %v476, %v504
        %v509 = vrot.slane %v404, 2
        %v510 = vrot.slane %v406, 1
        %v511 = vsel %vm439, %v510, %v509
        %v512 = vsel %vm442, %v408, %v511
        %v513 = vrot.slane %v410, 7
        %v514 = vsel %vm445, %v513, %v512
        %v515 = vrot.slane %v412, 6
        %v516 = vsel %vm448, %v515, %v514
        %v517 = vrot.slane %v414, 5
        %v518 = vsel %vm451, %v517, %v516
        %v519 = vrot.slane %v416, 4
        %v520 = vsel %vm454, %v519, %v518
        %v521 = vrot.slane %v418, 3
        %v522 = vsel %vm457, %v521, %v520
        %v523 = vrot.slane %v405, 2
        %v524 = vrot.slane %v407, 1
        %v525 = vsel %vm439, %v524, %v523
        %v526 = vsel %vm442, %v409, %v525
        %v527 = vrot.slane %v411, 7
        %v528 = vsel %vm445, %v527, %v526
        %v529 = vrot.slane %v413, 6
        %v530 = vsel %vm448, %v529, %v528
        %v531 = vrot.slane %v415, 5
        %v532 = vsel %vm451, %v531, %v530
        %v533 = vrot.slane %v417, 4
        %v534 = vsel %vm454, %v533, %v532
        %v535 = vrot.slane %v419, 3
        %v536 = vsel %vm457, %v535, %v534
        %v539 = vmax.f32 %v507, %v522
        %v540 = vmax.f32 %v508, %v536
        %v541 = vrot.slane %v404, 3
        %v542 = vrot.slane %v406, 2
        %v543 = vsel %vm439, %v542, %v541
        %v544 = vrot.slane %v408, 1
        %v545 = vsel %vm442, %v544, %v543
        %v546 = vsel %vm445, %v410, %v545
        %v547 = vrot.slane %v412, 7
        %v548 = vsel %vm448, %v547, %v546
        %v549 = vrot.slane %v414, 6
        %v550 = vsel %vm451, %v549, %v548
        %v551 = vrot.slane %v416, 5
        %v552 = vsel %vm454, %v551, %v550
        %v553 = vrot.slane %v418, 4
        %v554 = vsel %vm457, %v553, %v552
        %v555 = vrot.slane %v405, 3
        %v556 = vrot.slane %v407, 2
        %v557 = vsel %vm439, %v556, %v555
        %v558 = vrot.slane %v409, 1
        %v559 = vsel %vm442, %v558, %v557
        %v560 = vsel %vm445, %v411, %v559
        %v561 = vrot.slane %v413, 7
        %v562 = vsel %vm448, %v561, %v560
        %v563 = vrot.slane %v415, 6
        %v564 = vsel %vm451, %v563, %v562
        %v565 = vrot.slane %v417, 5
        %v566 = vsel %vm454, %v565, %v564
        %v567 = vrot.slane %v419, 4
        %v568 = vsel %vm457, %v567, %v566
        %v571 = vmax.f32 %v539, %v554
        %v572 = vmax.f32 %v540, %v568
        %v573 = vrot.slane %v404, 4
        %v574 = vrot.slane %v406, 3
        %v575 = vsel %vm439, %v574, %v573
        %v576 = vrot.slane %v408, 2
        %v577 = vsel %vm442, %v576, %v575
        %v578 = vrot.slane %v410, 1
        %v579 = vsel %vm445, %v578, %v577
        %v580 = vsel %vm448, %v412, %v579
        %v581 = vrot.slane %v414, 7
        %v582 = vsel %vm451, %v581, %v580
        %v583 = vrot.slane %v416, 6
        %v584 = vsel %vm454, %v583, %v582
        %v585 = vrot.slane %v418, 5
        %v586 = vsel %vm457, %v585, %v584
        %v587 = vrot.slane %v405, 4
        %v588 = vrot.slane %v407, 3
        %v589 = vsel %vm439, %v588, %v587
        %v590 = vrot.slane %v409, 2
        %v591 = vsel %vm442, %v590, %v589
        %v592 = vrot.slane %v411, 1
        %v593 = vsel %vm445, %v592, %v591
        %v594 = vsel %vm448, %v413, %v593
        %v595 = vrot.slane %v415, 7
        %v596 = vsel %vm451, %v595, %v594
        %v597 = vrot.slane %v417, 6
        %v598 = vsel %vm454, %v597, %v596
        %v599 = vrot.slane %v419, 5
        %v600 = vsel %vm457, %v599, %v598
        %v603 = vmax.f32 %v571, %v586
        %v604 = vmax.f32 %v572, %v600
        %v605 = vrot.slane %v404, 5
        %v606 = vrot.slane %v406, 4
        %v607 = vsel %vm439, %v606, %v605
        %v608 = vrot.slane %v408, 3
        %v609 = vsel %vm442, %v608, %v607
        %v610 = vrot.slane %v410, 2
        %v611 = vsel %vm445, %v610, %v609
        %v612 = vrot.slane %v412, 1
        %v613 = vsel %vm448, %v612, %v611
        %v614 = vsel %vm451, %v414, %v613
        %v615 = vrot.slane %v416, 7
        %v616 = vsel %vm454, %v615, %v614
        %v617 = vrot.slane %v418, 6
        %v618 = vsel %vm457, %v617, %v616
        %v619 = vrot.slane %v405, 5
        %v620 = vrot.slane %v407, 4
        %v621 = vsel %vm439, %v620, %v619
        %v622 = vrot.slane %v409, 3
        %v623 = vsel %vm442, %v622, %v621
        %v624 = vrot.slane %v411, 2
        %v625 = vsel %vm445, %v624, %v623
        %v626 = vrot.slane %v413, 1
        %v627 = vsel %vm448, %v626, %v625
        %v628 = vsel %vm451, %v415, %v627
        %v629 = vrot.slane %v417, 7
        %v630 = vsel %vm454, %v629, %v628
        %v631 = vrot.slane %v419, 6
        %v632 = vsel %vm457, %v631, %v630
        %v635 = vmax.f32 %v603, %v618
        %v636 = vmax.f32 %v604, %v632
        %v637 = vrot.slane %v404, 6
        %v638 = vrot.slane %v406, 5
        %v639 = vsel %vm439, %v638, %v637
        %v640 = vrot.slane %v408, 4
        %v641 = vsel %vm442, %v640, %v639
        %v642 = vrot.slane %v410, 3
        %v643 = vsel %vm445, %v642, %v641
        %v644 = vrot.slane %v412, 2
        %v645 = vsel %vm448, %v644, %v643
        %v646 = vrot.slane %v414, 1
        %v647 = vsel %vm451, %v646, %v645
        %v648 = vsel %vm454, %v416, %v647
        %v649 = vrot.slane %v418, 7
        %v650 = vsel %vm457, %v649, %v648
        %v651 = vrot.slane %v405, 6
        %v652 = vrot.slane %v407, 5
        %v653 = vsel %vm439, %v652, %v651
        %v654 = vrot.slane %v409, 4
        %v655 = vsel %vm442, %v654, %v653
        %v656 = vrot.slane %v411, 3
        %v657 = vsel %vm445, %v656, %v655
        %v658 = vrot.slane %v413, 2
        %v659 = vsel %vm448, %v658, %v657
        %v660 = vrot.slane %v415, 1
        %v661 = vsel %vm451, %v660, %v659
        %v662 = vsel %vm454, %v417, %v661
        %v663 = vrot.slane %v419, 7
        %v664 = vsel %vm457, %v663, %v662
        %v667 = vmax.f32 %v635, %v650
        %v668 = vmax.f32 %v636, %v664
        %v669 = vrot.slane %v404, 7
        %v670 = vrot.slane %v406, 6
        %v671 = vsel %vm439, %v670, %v669
        %v672 = vrot.slane %v408, 5
        %v673 = vsel %vm442, %v672, %v671
        %v674 = vrot.slane %v410, 4
        %v675 = vsel %vm445, %v674, %v673
        %v676 = vrot.slane %v412, 3
        %v677 = vsel %vm448, %v676, %v675
        %v678 = vrot.slane %v414, 2
        %v679 = vsel %vm451, %v678, %v677
        %v680 = vrot.slane %v416, 1
        %v681 = vsel %vm454, %v680, %v679
        %v682 = vsel %vm457, %v418, %v681
        %v683 = vrot.slane %v405, 7
        %v684 = vrot.slane %v407, 6
        %v685 = vsel %vm439, %v684, %v683
        %v686 = vrot.slane %v409, 5
        %v687 = vsel %vm442, %v686, %v685
        %v688 = vrot.slane %v411, 4
        %v689 = vsel %vm445, %v688, %v687
        %v690 = vrot.slane %v413, 3
        %v691 = vsel %vm448, %v690, %v689
        %v692 = vrot.slane %v415, 2
        %v693 = vsel %vm451, %v692, %v691
        %v694 = vrot.slane %v417, 1
        %v695 = vsel %vm454, %v694, %v693
        %v696 = vsel %vm457, %v419, %v695
        %v699 = vmax.f32 %v667, %v682
        %v700 = vmax.f32 %v668, %v696
        %701 = vst [vmem:[#allocation2] sm:$0xff] %v699
        %702 = vst [vmem:[#allocation2 + $0x8] sm:$0xff] %v700
        %p703 = scmp.eq.s32.totalorder %s32, 1
        // Predicated region
        $region73: #{tpu_custom_call.1} parent=55 // pred_check
          %p704 = pneg %p703
        $region74: #{tpu_custom_call.1} parent=55 // pred_check_branch
          %706 = sbr.rel (%p704) target = $region76
        $region75: #{tpu_custom_call.1} parent=55 // pred_region
          %v707 = vld [vmem:[#allocation2] sm:$0xff]
          %v708 = vld [vmem:[#allocation2 + $0x8] sm:$0xff]
          %v709 = vadd.f32 %v707, %v708
          %710 = vadd.xlane.f32.xlu0 %v709
          %v711 = vpop.xlane.xlu0 %710
          %v712 = vrcp.pop 256.0
          %v713 = vmul.f32 %v711, %v712
          %v714 = vsub.f32 %v707, %v713
          %v715 = vsub.f32 %v708, %v713
          %v716 = vmul.f32 %v714, %v714
          %v717 = vmul.f32 %v715, %v715
          %v718 = vadd.f32 %v716, %v717
          %719 = vadd.xlane.f32.xlu0 %v718
          %v720 = vpop.xlane.xlu0 %719
          %v721 = vmul.f32 %v720, %v712
          %v722 = vadd.f32 %v721, 1e-05
          %v723 = vrsqrt.pop %v722
          %v724 = vmul.f32 %v714, %v723
          %v725 = vmul.f32 %v715, %v723
          %v726 = vld [vmem:[%s1] sm:$0x3]
          %v728 = vlaneseq
          %v729 = vshrl.u32 %v728, 7
          %v730 = vsub.s32 0, %v729
          %v731 = vrot.slane %v726, %v730
          %v732 = vlaneseq
          %v733 = vshrl.u32 %v732, 7
          %v734 = vsub.s32 1, %v733
          %v735 = vrot.slane %v726, %v734
          %v738 = vmul.f32 %v724, %v731
          %v739 = vmul.f32 %v725, %v735
          %v740 = vld [vmem:[%s2] sm:$0x3]
          %v742 = vlaneseq
          %v743 = vshrl.u32 %v742, 7
          %v744 = vsub.s32 0, %v743
          %v745 = vrot.slane %v740, %v744
          %v746 = vlaneseq
          %v747 = vshrl.u32 %v746, 7
          %v748 = vsub.s32 1, %v747
          %v749 = vrot.slane %v740, %v748
          %v752 = vadd.f32 %v738, %v745
          %v753 = vadd.f32 %v739, %v749
          %v754 = vmax.f32 %v752, 0.0
          %v755 = vmax.f32 %v753, 0.0
          %v756 = vld [vmem:[#allocation6] sm:$0xff]
          %v757 = vld [vmem:[#allocation6 + $0x8] sm:$0xff]
          %v758 = vld [vmem:[#allocation6 + $0x10] sm:$0xff]
          %v759 = vld [vmem:[#allocation6 + $0x18] sm:$0xff]
          %v760 = vld [vmem:[#allocation6 + $0x20] sm:$0xff]
          %v761 = vld [vmem:[#allocation6 + $0x28] sm:$0xff]
          %v762 = vld [vmem:[#allocation6 + $0x30] sm:$0xff]
          %v763 = vld [vmem:[#allocation6 + $0x38] sm:$0xff]
          %v764 = vld [vmem:[#allocation6 + $0x40] sm:$0xff]
          %v765 = vld [vmem:[#allocation6 + $0x48] sm:$0xff]
          %v766 = vld [vmem:[#allocation6 + $0x50] sm:$0xff]
          %v767 = vld [vmem:[#allocation6 + $0x58] sm:$0xff]
          %v768 = vld [vmem:[#allocation6 + $0x60] sm:$0xff]
          %v769 = vld [vmem:[#allocation6 + $0x68] sm:$0xff]
          %v770 = vld [vmem:[#allocation6 + $0x70] sm:$0xff]
          %v771 = vld [vmem:[#allocation6 + $0x78] sm:$0xff]
          %v772 = vld [vmem:[#allocation6 + $0x80] sm:$0xff]
          %v773 = vld [vmem:[#allocation6 + $0x88] sm:$0xff]
          %v774 = vld [vmem:[#allocation6 + $0x90] sm:$0xff]
          %v775 = vld [vmem:[#allocation6 + $0x98] sm:$0xff]
          %v776 = vld [vmem:[#allocation6 + $0xa0] sm:$0xff]
          %v777 = vld [vmem:[#allocation6 + $0xa8] sm:$0xff]
          %v778 = vld [vmem:[#allocation6 + $0xb0] sm:$0xff]
          %v779 = vld [vmem:[#allocation6 + $0xb8] sm:$0xff]
          %v780 = vld [vmem:[#allocation6 + $0xc0] sm:$0xff]
          %v781 = vld [vmem:[#allocation6 + $0xc8] sm:$0xff]
          %v782 = vld [vmem:[#allocation6 + $0xd0] sm:$0xff]
          %v783 = vld [vmem:[#allocation6 + $0xd8] sm:$0xff]
          %v784 = vld [vmem:[#allocation6 + $0xe0] sm:$0xff]
          %v785 = vld [vmem:[#allocation6 + $0xe8] sm:$0xff]
          %v786 = vld [vmem:[#allocation6 + $0xf0] sm:$0xff]
          %v787 = vld [vmem:[#allocation6 + $0xf8] sm:$0xff]
          %v788 = vld [vmem:[%s4] sm:$0x1]
          %v790 = vlaneseq
          %v791 = vshrl.u32 %v790, 7
          %v792 = vsub.s32 0, %v791
          %v793 = vrot.slane %v788, %v792
          %795 = vmatprep.subr.mxu0 0.0
          %796 = vmatpush1.msra.mxu0 %v756
          %797 = vmatprep.subr.mxu0 0.0
          %798 = vmatpush1.msra.mxu0 %v757
          %799 = vmatprep.subr.mxu0 0.0
          %800 = vmatpush1.msra.mxu0 %v758
          %801 = vmatprep.subr.mxu0 0.0
          %802 = vmatpush1.msra.mxu0 %v759
          %803 = vmatprep.subr.mxu0 0.0
          %804 = vmatpush1.msra.mxu0 %v760
          %805 = vmatprep.subr.mxu0 0.0
          %806 = vmatpush1.msra.mxu0 %v761
          %807 = vmatprep.subr.mxu0 0.0
          %808 = vmatpush1.msra.mxu0 %v762
          %809 = vmatprep.subr.mxu0 0.0
          %810 = vmatpush1.msra.mxu0 %v763
          %811 = vmatprep.subr.mxu0 0.0
          %812 = vmatpush1.msra.mxu0 %v764
          %813 = vmatprep.subr.mxu0 0.0
          %814 = vmatpush1.msra.mxu0 %v765
          %815 = vmatprep.subr.mxu0 0.0
          %816 = vmatpush1.msra.mxu0 %v766
          %817 = vmatprep.subr.mxu0 0.0
          %818 = vmatpush1.msra.mxu0 %v767
          %819 = vmatprep.subr.mxu0 0.0
          %820 = vmatpush1.msra.mxu0 %v768
          %821 = vmatprep.subr.mxu0 0.0
          %822 = vmatpush1.msra.mxu0 %v769
          %823 = vmatprep.subr.mxu0 0.0
          %824 = vmatpush1.msra.mxu0 %v770
          %825 = vmatprep.subr.mxu0 0.0
          %826 = vmatpush1.msra.mxu0 %v771
          %827 = vmatprep.subr.mxu0 0.0
          %828 = vmatpush1.msra.mxu0 %v772
          %829 = vmatprep.subr.mxu0 0.0
          %830 = vmatpush1.msra.mxu0 %v773
          %831 = vmatprep.subr.mxu0 0.0
          %832 = vmatpush1.msra.mxu0 %v774
          %833 = vmatprep.subr.mxu0 0.0
          %834 = vmatpush1.msra.mxu0 %v775
          %835 = vmatprep.subr.mxu0 0.0
          %836 = vmatpush1.msra.mxu0 %v776
          %837 = vmatprep.subr.mxu0 0.0
          %838 = vmatpush1.msra.mxu0 %v777
          %839 = vmatprep.subr.mxu0 0.0
          %840 = vmatpush1.msra.mxu0 %v778
          %841 = vmatprep.subr.mxu0 0.0
          %842 = vmatpush1.msra.mxu0 %v779
          %843 = vmatprep.subr.mxu0 0.0
          %844 = vmatpush1.msra.mxu0 %v780
          %845 = vmatprep.subr.mxu0 0.0
          %846 = vmatpush1.msra.mxu0 %v781
          %847 = vmatprep.subr.mxu0 0.0
          %848 = vmatpush1.msra.mxu0 %v782
          %849 = vmatprep.subr.mxu0 0.0
          %850 = vmatpush1.msra.mxu0 %v783
          %851 = vmatprep.subr.mxu0 0.0
          %852 = vmatpush1.msra.mxu0 %v784
          %853 = vmatprep.subr.mxu0 0.0
          %854 = vmatpush1.msra.mxu0 %v785
          %855 = vmatprep.subr.mxu0 0.0
          %856 = vmatpush1.msra.mxu0 %v786
          %857 = vmatprep.subr.mxu0 0.0
          %858 = vmatpush1.msra.mxu0 %v787
          %859 = vmatprep.mubr.f32.mxu0 %v755
          %860 = vmatmul.mubr.f32.gmra.mrb[0].mxu0 %v754
          %v861 = vpop.f32.mrb[0].mxu0
          %v862 = vadd.f32 %v793, %v861
          %v863 = vpop.f32.mrb[0].mxu0
          %864 = vdwg.mxu0
          %865 = vadd.xlane.f32.xlu0 %v862
          %v866 = vpop.xlane.xlu0 %865
          %v867 = vrcp.pop 128.0
          %v868 = vmul.f32 %v866, %v867
          %v869 = vsub.f32 %v862, %v868
          %v870 = vmul.f32 %v869, %v869
          %871 = vadd.xlane.f32.xlu0 %v870
          %v872 = vpop.xlane.xlu0 %871
          %v873 = vmul.f32 %v872, %v867
          %v874 = vadd.f32 %v873, 1e-05
          %v875 = vrsqrt.pop %v874
          %v876 = vmul.f32 %v869, %v875
          %v877 = vld [vmem:[%s5] sm:$0x1]
          %v879 = vlaneseq
          %v880 = vshrl.u32 %v879, 7
          %v881 = vsub.s32 0, %v880
          %v882 = vrot.slane %v877, %v881
          %v884 = vmul.f32 %v876, %v882
          %v885 = vld [vmem:[%s6] sm:$0x1]
          %v887 = vlaneseq
          %v888 = vshrl.u32 %v887, 7
          %v889 = vsub.s32 0, %v888
          %v890 = vrot.slane %v885, %v889
          %v892 = vadd.f32 %v884, %v890
          %v893 = vmax.f32 %v892, 0.0
          %v894 = vld [vmem:[#allocation8] sm:$0xff]
          %v895 = vld [vmem:[#allocation8 + $0x8] sm:$0xff]
          %v896 = vld [vmem:[#allocation8 + $0x10] sm:$0xff]
          %v897 = vld [vmem:[#allocation8 + $0x18] sm:$0xff]
          %v898 = vld [vmem:[#allocation8 + $0x20] sm:$0xff]
          %v899 = vld [vmem:[#allocation8 + $0x28] sm:$0xff]
          %v900 = vld [vmem:[#allocation8 + $0x30] sm:$0xff]
          %v901 = vld [vmem:[#allocation8 + $0x38] sm:$0xff]
          %v902 = vld [vmem:[#allocation8 + $0x40] sm:$0xff]
          %v903 = vld [vmem:[#allocation8 + $0x48] sm:$0xff]
          %v904 = vld [vmem:[#allocation8 + $0x50] sm:$0xff]
          %v905 = vld [vmem:[#allocation8 + $0x58] sm:$0xff]
          %v906 = vld [vmem:[#allocation8 + $0x60] sm:$0xff]
          %v907 = vld [vmem:[#allocation8 + $0x68] sm:$0xff]
          %v908 = vld [vmem:[#allocation8 + $0x70] sm:$0xff]
          %v909 = vld [vmem:[#allocation8 + $0x78] sm:$0xff]
          %v910 = vld [vmem:[%s8] sm:$0x1]
          %v912 = vlaneseq
          %v913 = vshrl.u32 %v912, 7
          %v914 = vsub.s32 0, %v913
          %v915 = vrot.slane %v910, %v914
          %917 = vmatprep.subr.mxu0 0.0
          %918 = vmatpush1.msra.mxu0 %v894
          %919 = vmatprep.subr.mxu0 0.0
          %920 = vmatpush1.msra.mxu0 %v895
          %921 = vmatprep.subr.mxu0 0.0
          %922 = vmatpush1.msra.mxu0 %v896
          %923 = vmatprep.subr.mxu0 0.0
          %924 = vmatpush1.msra.mxu0 %v897
          %925 = vmatprep.subr.mxu0 0.0
          %926 = vmatpush1.msra.mxu0 %v898
          %927 = vmatprep.subr.mxu0 0.0
          %928 = vmatpush1.msra.mxu0 %v899
          %929 = vmatprep.subr.mxu0 0.0
          %930 = vmatpush1.msra.mxu0 %v900
          %931 = vmatprep.subr.mxu0 0.0
          %932 = vmatpush1.msra.mxu0 %v901
          %933 = vmatprep.subr.mxu0 0.0
          %934 = vmatpush1.msra.mxu0 %v902
          %935 = vmatprep.subr.mxu0 0.0
          %936 = vmatpush1.msra.mxu0 %v903
          %937 = vmatprep.subr.mxu0 0.0
          %938 = vmatpush1.msra.mxu0 %v904
          %939 = vmatprep.subr.mxu0 0.0
          %940 = vmatpush1.msra.mxu0 %v905
          %941 = vmatprep.subr.mxu0 0.0
          %942 = vmatpush1.msra.mxu0 %v906
          %943 = vmatprep.subr.mxu0 0.0
          %944 = vmatpush1.msra.mxu0 %v907
          %945 = vmatprep.subr.mxu0 0.0
          %946 = vmatpush1.msra.mxu0 %v908
          %947 = vmatprep.subr.mxu0 0.0
          %948 = vmatpush1.msra.mxu0 %v909
          %949 = vmatprep.subr.mxu0 0.0
          %950 = vmatpush1.msra.mxu0 0.0
          %951 = vmatprep.subr.mxu0 0.0
          %952 = vmatpush1.msra.mxu0 0.0
          %953 = vmatprep.subr.mxu0 0.0
          %954 = vmatpush1.msra.mxu0 0.0
          %955 = vmatprep.subr.mxu0 0.0
          %956 = vmatpush1.msra.mxu0 0.0
          %957 = vmatprep.subr.mxu0 0.0
          %958 = vmatpush1.msra.mxu0 0.0
          %959 = vmatprep.subr.mxu0 0.0
          %960 = vmatpush1.msra.mxu0 0.0
          %961 = vmatprep.subr.mxu0 0.0
          %962 = vmatpush1.msra.mxu0 0.0
          %963 = vmatprep.subr.mxu0 0.0
          %964 = vmatpush1.msra.mxu0 0.0
          %965 = vmatprep.subr.mxu0 0.0
          %966 = vmatpush1.msra.mxu0 0.0
          %967 = vmatprep.subr.mxu0 0.0
          %968 = vmatpush1.msra.mxu0 0.0
          %969 = vmatprep.subr.mxu0 0.0
          %970 = vmatpush1.msra.mxu0 0.0
          %971 = vmatprep.subr.mxu0 0.0
          %972 = vmatpush1.msra.mxu0 0.0
          %973 = vmatprep.subr.mxu0 0.0
          %974 = vmatpush1.msra.mxu0 0.0
          %975 = vmatprep.subr.mxu0 0.0
          %976 = vmatpush1.msra.mxu0 0.0
          %977 = vmatprep.subr.mxu0 0.0
          %978 = vmatpush1.msra.mxu0 0.0
          %979 = vmatprep.subr.mxu0 0.0
          %980 = vmatpush1.msra.mxu0 0.0
          %981 = vmatprep.mubr.f32.mxu0 0.0
          %982 = vmatmul.mubr.f32.gmra.mrb[0].mxu0 %v893
          %v983 = vpop.f32.mrb[0].mxu0
          %v984 = vadd.f32 %v915, %v983
          %v985 = vpop.f32.mrb[0].mxu0
          %986 = vdwg.mxu0
          %987 = vst [vmem:[%s396] sm:$0xff] %v984
        $region76: #{tpu_custom_call.1} parent=55 // pred_fallthru
          _
        %s988 = sand.u32 %s243, 1
        %s989 = scalar_lea.sflag [#allocation5], %s988
        %s990 = sand.u32 %s243, 1
        %s991 = smul.addr %s990, 8
        %s992 = scalar_lea.vmem [#allocation9], %s991
        // Predicated region
        $region77: #{tpu_custom_call.1} parent=55 // pred_check
          %p993 = pneg %p253
        $region78: #{tpu_custom_call.1} parent=55 // pred_check_branch
          %995 = sbr.rel (%p993) target = $region80
        $region79: #{tpu_custom_call.1} parent=55 // pred_region
          %s997 = ssub.s32 128, 128
          %998 = vsyncadd %s989, %s997
          %s999 = smul.addr %s31, 128
          %s1000 = scalar_lea.hbm %s9, %s999
          %s1002 = sshll.u32 %s992, 4
          %s1003 = int_to_ptr.vmem [resolvable:$true] %s1002
          %1005 = dma.vmem_to_hbm [thread:$0]  %s1003, 128, %s1000, %s989
        $region80: #{tpu_custom_call.1} parent=55 // pred_fallthru
          _
      $region56: #{tpu_custom_call.1} parent=5 // pred_fallthru
        _
      %p1006 = scmp.le.s32.totalorder 2, %s22
      // Predicated region
      $region81: #{tpu_custom_call.1} parent=5 // pred_check
        %p1007 = pneg %p1006
      $region82: #{tpu_custom_call.1} parent=5 // pred_check_branch
        %1009 = sbr.rel (%p1007) target = $region84
      $region83: #{tpu_custom_call.1} parent=5 // pred_region
        %s1010 = ssub.s32 %s22, 2
        // Predicated region
        $region85: #{tpu_custom_call.1} parent=83 // pred_check
          %p1011 = pneg %p259
        $region86: #{tpu_custom_call.1} parent=83 // pred_check_branch
          %1013 = sbr.rel (%p1011) target = $region88
        $region87: #{tpu_custom_call.1} parent=83 // pred_region
          %s1014 = sand.u32 %s244, 1
          %s1015 = scalar_lea.sflag [#allocation5], %s1014
          %s1016 = sand.u32 %s244, 1
          %s1017 = smul.addr %s1016, 8
          %s1018 = scalar_lea.vmem [#allocation9], %s1017
          %1019 = dma.done %s1015, 128
        $region88: #{tpu_custom_call.1} parent=83 // pred_fallthru
          _
      $region84: #{tpu_custom_call.1} parent=5 // pred_fallthru
        _
    $region6: #{tpu_custom_call.1} parent=1 // loop_footer
      %s26 = sadd.s32 1, %s22
    $region7: #{tpu_custom_call.1} parent=1 // loop_footer_branch
      %21 = sbr.rel target = $region3
    $region8: #{tpu_custom_call.1} parent=1 // loop_exit
      _
    %1020 = vsyncpa [#allocation4], 1
    %s1021 = scalar_lea.sflag [#allocation4], 1
    %1022 = vsyncpa %s1021, 1
    %1023 = vsyncpa [#allocation7], 1
    %1024 = vsyncpa [#allocation5], 1
    %s1025 = scalar_lea.sflag [#allocation5], 1
    %1026 = vsyncpa %s1025, 1

</llo_original>
